<compile_context>
chip_gen: v5e
topology: v5e:2x2
jax: 0.10.0
libtpu: 0.0.40
codegen_flags: <defaults>
</compile_context>

<pallas_src>
import jax
import jax.numpy as jnp
from jax.experimental import pallas as pl
from jax.experimental.pallas import tpu as pltpu

STATE_FEATS = 21       # state features
IN_FEATS = 22          # state features + 1 action
G_MAX = 256            # graphs per grid step (bounded by (8,128) lane padding of row blocks)


def _round_up(x, m):
    return ((x + m - 1) // m) * m


def _cdiv(a, b):
    return (a + b - 1) // b


def _critic_kernel(state_ref, action_ref, bands_ref,
                   wgs_ref, wga_ref, bg_ref,
                   w1_ref, w1s_ref, w1a_ref, b1_ref,
                   w2_ref, b2_ref, w3_ref,
                   out_ref):
    # One grid step == one tile of G graphs, flattened to R = G*act_dim node rows.
    st = state_ref[...]                      # (R, 21)
    ac = action_ref[...]                     # (R, 1)
    bands = bands_ref[...]                   # (R, 2*act_dim - 1)

    nb = bands.shape[-1]
    a_dim = (nb + 1) // 2
    rows = st.shape[0]

    # GCNConv input transform over the whole tile: cat([state, action]) @ Wg with the weight
    # split by rows, so the concat is never built.  One MXU dot + one VPU rank-1 update.
    xw = (jnp.dot(st, wgs_ref[...], preferred_element_type=jnp.float32)
          + ac * wga_ref[...])               # (R, 22)

    # Block-diagonal Ahat @ xw as a banded contraction: sublane rolls (XLU) + broadcast
    # MACs (VPU).  Band coefficients are zero across graph/tile boundaries, so the circular
    # wrap of the roll never contributes.
    agg = bands[:, a_dim - 1:a_dim] * xw     # d = 0 term
    for k in range(nb):
        d = k - (a_dim - 1)
        if d == 0:
            continue
        shifted = pltpu.roll(xw, shift=(-d) % rows, axis=0)   # shifted[n] = xw[(n + d) % R]
        agg = agg + bands[:, k:k + 1] * shifted

    gcn = jnp.maximum(agg + bg_ref[...], 0.0)                 # (R, 22)  ReLU(conv1)

    # lin1 with the residual (gcn + cat([state, action])) folded via row-split weights.
    z = (jnp.dot(gcn, w1_ref[...], preferred_element_type=jnp.float32)
         + jnp.dot(st, w1s_ref[...], preferred_element_type=jnp.float32)
         + ac * w1a_ref[...]
         + b1_ref[...])
    z = jnp.maximum(z, 0.0)                                   # (R, H)

    # lin2.
    z = jnp.maximum(jnp.dot(z, w2_ref[...], preferred_element_type=jnp.float32)
                    + b2_ref[...], 0.0)                       # (R, H)

    # lin3 applied per node; it commutes with the per-graph readout sum (done outside).
    out_ref[...] = jnp.dot(z, w3_ref[...], preferred_element_type=jnp.float32)   # (R, 1)


def build_band_coefficients(edge_index, num_graphs, act_dim):
    """GCN-normalized banded adjacency coefficients, shape (B*act_dim, 2*act_dim-1).

    band[g*act_dim + i, k] = Ahat_g[i, i + (k - (act_dim-1))], zero outside the graph, so
    (Ahat_blockdiag @ X)[n] = sum_k band[n, k] * X[n + k - (act_dim-1)].
    Assumes PyG-style batching (edges never cross graph boundaries; crossing edges dropped).
    Hoist this out of the per-call path when the graph is static.
    """
    a = act_dim
    src, dst = edge_index[0], edge_index[1]
    g = dst // a
    i = dst % a
    j = src % a
    same = (src // a) == g
    w = jnp.where(same, 1.0, 0.0).astype(jnp.float32)
    blk = jnp.zeros((num_graphs, a, a), jnp.float32).at[g, i, j].add(w)
    blk = blk + jnp.eye(a, dtype=jnp.float32)[None]                 # self loops
    dinv = jax.lax.rsqrt(jnp.sum(blk, axis=2))                      # (B, A)
    ahat = dinv[:, :, None] * blk * dinv[:, None, :]                # (B, A, A)

    nb = 2 * a - 1
    ii = jnp.arange(a)
    dd = jnp.arange(nb) - (a - 1)
    jj = ii[:, None] + dd[None, :]                                  # (A, NB): j = i + d
    valid = (jj >= 0) & (jj < a)
    jj_c = jnp.clip(jj, 0, a - 1)
    bands = ahat[:, ii[:, None], jj_c]                              # (B, A, NB)
    bands = jnp.where(valid[None, :, :], bands, 0.0)
    return bands.reshape(num_graphs * a, nb)


def gnn_critic3_forward(state, action, bands, params, *, act_dim):
    """state: (N, 21) f32, action: (N,) f32, bands: (N, 2*act_dim-1) from
    build_band_coefficients.  Returns q: (B,), B = N // act_dim."""
    N = state.shape[0]
    assert N % act_dim == 0, "N must be a multiple of act_dim"
    B = N // act_dim
    nb = 2 * act_dim - 1

    wg, bg, w1, b1, w2, b2, w3, b3 = params
    H = w1.shape[1]

    # --- tile sizing: G graphs per grid step --------------------------------------------
    if B <= 4:
        G = _round_up(B, 4)                            # R = 6G stays a multiple of 8
    else:
        n_tiles_target = max(2, _cdiv(B, G_MAX))       # >=2 steps keeps both v7x TCs busy
        G = _round_up(_cdiv(B, n_tiles_target), 4)
    B_pad = _round_up(B, G)
    N_pad = B_pad * act_dim
    R = G * act_dim                                    # node rows per tile
    n_tiles = B_pad // G

    # --- operands (no (N, 22) concat materialized; Wg / W1 are row-split) ---------------
    st = state.astype(jnp.float32)
    ac = action.astype(jnp.float32).reshape(N, 1)
    bd = bands.astype(jnp.float32)
    if N_pad != N:
        pad = ((0, N_pad - N), (0, 0))
        st, ac, bd = jnp.pad(st, pad), jnp.pad(ac, pad), jnp.pad(bd, pad)

    wg_s, wg_a = wg[:STATE_FEATS, :], wg[STATE_FEATS:, :]
    w1_s, w1_a = w1[:STATE_FEATS, :], w1[STATE_FEATS:, :]

    def row_spec(width):
        return pl.BlockSpec((R, width), lambda t: (t, 0))

    def res_spec(shape):
        return pl.BlockSpec(shape, lambda t: (0, 0))

    q_nodes = pl.pallas_call(
        _critic_kernel,
        out_shape=jax.ShapeDtypeStruct((N_pad, 1), jnp.float32),
        grid=(n_tiles,),
        in_specs=[
            row_spec(STATE_FEATS),               # state rows
            row_spec(1),                         # action rows
            row_spec(nb),                        # banded adjacency coefficients
            res_spec((STATE_FEATS, IN_FEATS)),   # wg[:21]
            res_spec((1, IN_FEATS)),             # wg[21:22]
            res_spec((1, IN_FEATS)),             # bg
            res_spec((IN_FEATS, H)),             # w1 (applied to gcn output)
            res_spec((STATE_FEATS, H)),          # w1[:21]  (residual, state part)
            res_spec((1, H)),                    # w1[21:22] (residual, action part)
            res_spec((1, H)),                    # b1
            res_spec((H, H)),                    # w2
            res_spec((1, H)),                    # b2
            res_spec((H, 1)),                    # w3
        ],
        out_specs=row_spec(1),
        compiler_params=pltpu.CompilerParams(
            dimension_semantics=("parallel",),
            vmem_limit_bytes=32 * 1024 * 1024),
    )(st, ac, bd,
      wg_s, wg_a, bg.reshape(1, IN_FEATS),
      w1, w1_s, w1_a, b1.reshape(1, H),
      w2, b2.reshape(1, H),
      w3)

    # Per-graph readout sum + lin3 bias (lin3 is linear, so applying it per node inside the
    # kernel and summing here is exact).  Tiny XLA epilogue on (N,) values.
    q = q_nodes[:N, 0].reshape(B, act_dim).sum(axis=1) + b3[0]
    return q


def init_params(key, hidden_size=32):
    ks = jax.random.split(key, 8)
    wg = jax.random.normal(ks[0], (IN_FEATS, IN_FEATS), jnp.float32) * 0.2   # GCNConv weight
    bg = jax.random.normal(ks[1], (IN_FEATS,), jnp.float32) * 0.1            # GCNConv bias
    w1 = jax.random.normal(ks[2], (IN_FEATS, hidden_size), jnp.float32) * 0.2
    b1 = jax.random.normal(ks[3], (hidden_size,), jnp.float32) * 0.1
    w2 = jax.random.normal(ks[4], (hidden_size, hidden_size), jnp.float32) * 0.2
    b2 = jax.random.normal(ks[5], (hidden_size,), jnp.float32) * 0.1
    w3 = jax.random.normal(ks[6], (hidden_size, 1), jnp.float32) * 0.2
    b3 = jax.random.normal(ks[7], (1,), jnp.float32) * 0.1
    return (wg, bg, w1, b1, w2, b2, w3, b3)


def _reference(state, edge_index, action, params, *, act_dim):
    """Pure-JAX reference of the PyTorch forward (dense adjacency; sanity check)."""
    wg, bg, w1, b1, w2, b2, w3, b3 = params
    N = state.shape[0]
    x = jnp.concatenate([state, action[:, None]], axis=-1)
    src, dst = edge_index[0], edge_index[1]
    A = jnp.zeros((N, N), jnp.float32).at[dst, src].add(1.0) + jnp.eye(N)
    dinv = jax.lax.rsqrt(jnp.sum(A, axis=1))
    adj = dinv[:, None] * A * dinv[None, :]
    out = jax.nn.relu(adj @ (x @ wg) + bg)
    h = out + x
    h = h.reshape(-1, act_dim, IN_FEATS)
    z = jax.nn.relu(h @ w1 + b1)
    z = jax.nn.relu(z @ w2 + b2)
    z = jnp.sum(z, axis=1)
    return (z @ w3 + b3)[:, 0]


if __name__ == "__main__":
    key = jax.random.PRNGKey(0)
    B, act_dim, hidden = 2, 6, 32
    N = B * act_dim

    k_state, k_action, k_params = jax.random.split(key, 3)
    state = jax.random.normal(k_state, (N, 21), jnp.float32)
    action = jax.random.uniform(k_action, (N,), jnp.float32)

    # Deterministic per-graph ring (both directions), PyG-style batching: each batch
    # element is its own act_dim-node graph, no cross-graph edges.
    local = jnp.arange(act_dim, dtype=jnp.int32)
    offs = (jnp.arange(B, dtype=jnp.int32) * act_dim)[:, None]
    s = (offs + local).reshape(-1)
    d = (offs + (local + 1) % act_dim).reshape(-1)
    edge_index = jnp.stack([jnp.concatenate([s, d]),
                            jnp.concatenate([d, s])], axis=0)      # (2, 2N)

    params = init_params(k_params, hidden)

    # Banded adjacency coefficients hoisted out of the per-call path (static graph).
    bands = build_band_coefficients(edge_index, B, act_dim)        # (N, 2*act_dim-1)

    q = gnn_critic3_forward(state, action, bands, params, act_dim=act_dim)
    q = jax.block_until_ready(q)

    q_ref = _reference(state, edge_index, action, params, act_dim=act_dim)
    assert q.shape == (B,)
    assert jnp.allclose(q, q_ref, atol=1e-4, rtol=1e-4), (q, q_ref)

    print("KERNEL_OK")
</pallas_src>

<mosaic_0001>
module attributes {stable_mosaic.version = 11 : i64} {
  func.func @_critic_kernel(%arg0: i32, %arg1: memref<24x21xf32, #tpu.memory_space<vmem>>, %arg2: memref<24x1xf32, #tpu.memory_space<vmem>>, %arg3: memref<24x11xf32, #tpu.memory_space<vmem>>, %arg4: memref<21x22xf32, #tpu.memory_space<vmem>>, %arg5: memref<1x22xf32, #tpu.memory_space<vmem>>, %arg6: memref<1x22xf32, #tpu.memory_space<vmem>>, %arg7: memref<22x32xf32, #tpu.memory_space<vmem>>, %arg8: memref<21x32xf32, #tpu.memory_space<vmem>>, %arg9: memref<1x32xf32, #tpu.memory_space<vmem>>, %arg10: memref<1x32xf32, #tpu.memory_space<vmem>>, %arg11: memref<32x32xf32, #tpu.memory_space<vmem>>, %arg12: memref<1x32xf32, #tpu.memory_space<vmem>>, %arg13: memref<32x1xf32, #tpu.memory_space<vmem>>, %arg14: memref<24x1xf32, #tpu.memory_space<vmem>>) attributes {dimension_semantics = [#tpu.dimension_semantics<parallel>], iteration_bounds = array<i64: 1>, scalar_prefetch = 0 : i64, scratch_operands = 0 : i64, tpu.core_type = #tpu.core_type<tc>, window_params = [{transform_indices = @transform_0, window_bounds = array<i64: 24, 21>}, {transform_indices = @transform_1, window_bounds = array<i64: 24, 1>}, {transform_indices = @transform_2, window_bounds = array<i64: 24, 11>}, {pipeline_mode = #tpu.pipeline_mode<synchronous>, transform_indices = @transform_3, window_bounds = array<i64: 21, 22>}, {pipeline_mode = #tpu.pipeline_mode<synchronous>, transform_indices = @transform_4, window_bounds = array<i64: 1, 22>}, {pipeline_mode = #tpu.pipeline_mode<synchronous>, transform_indices = @transform_5, window_bounds = array<i64: 1, 22>}, {pipeline_mode = #tpu.pipeline_mode<synchronous>, transform_indices = @transform_6, window_bounds = array<i64: 22, 32>}, {pipeline_mode = #tpu.pipeline_mode<synchronous>, transform_indices = @transform_7, window_bounds = array<i64: 21, 32>}, {pipeline_mode = #tpu.pipeline_mode<synchronous>, transform_indices = @transform_8, window_bounds = array<i64: 1, 32>}, {pipeline_mode = #tpu.pipeline_mode<synchronous>, transform_indices = @transform_9, window_bounds = array<i64: 1, 32>}, {pipeline_mode = #tpu.pipeline_mode<synchronous>, transform_indices = @transform_10, window_bounds = array<i64: 32, 32>}, {pipeline_mode = #tpu.pipeline_mode<synchronous>, transform_indices = @transform_11, window_bounds = array<i64: 1, 32>}, {pipeline_mode = #tpu.pipeline_mode<synchronous>, transform_indices = @transform_12, window_bounds = array<i64: 32, 1>}, {transform_indices = @transform_13, window_bounds = array<i64: 24, 1>}]} {
    %c0 = arith.constant 0 : index
    %c0_0 = arith.constant 0 : index
    %0 = vector.load %arg1[%c0, %c0_0] : memref<24x21xf32, #tpu.memory_space<vmem>>, vector<24x21xf32>
    %c0_1 = arith.constant 0 : index
    %c0_2 = arith.constant 0 : index
    %1 = vector.load %arg2[%c0_1, %c0_2] : memref<24x1xf32, #tpu.memory_space<vmem>>, vector<24x1xf32>
    %c0_3 = arith.constant 0 : index
    %c0_4 = arith.constant 0 : index
    %2 = vector.load %arg3[%c0_3, %c0_4] : memref<24x11xf32, #tpu.memory_space<vmem>>, vector<24x11xf32>
    %c0_5 = arith.constant 0 : index
    %c0_6 = arith.constant 0 : index
    %3 = vector.load %arg4[%c0_5, %c0_6] : memref<21x22xf32, #tpu.memory_space<vmem>>, vector<21x22xf32>
    %cst = arith.constant dense<0.000000e+00> : vector<24x22xf32>
    %4 = tpu.matmul %0, %3, %cst {dimension_numbers = #tpu.dot_dimension_numbers<[1], [0], [0], [1], [0, 0, 1, 1], [], []>} : vector<24x21xf32>, vector<21x22xf32>, vector<24x22xf32> -> vector<24x22xf32>
    %c0_7 = arith.constant 0 : index
    %c0_8 = arith.constant 0 : index
    %5 = vector.load %arg5[%c0_7, %c0_8] : memref<1x22xf32, #tpu.memory_space<vmem>>, vector<1x22xf32>
    %6 = vector.broadcast %1 : vector<24x1xf32> to vector<24x22xf32>
    %7 = vector.broadcast %5 : vector<1x22xf32> to vector<24x22xf32>
    %8 = arith.mulf %6, %7 : vector<24x22xf32>
    %9 = arith.addf %4, %8 : vector<24x22xf32>
    %10 = vector.extract_strided_slice %2 {offsets = [0, 5], sizes = [24, 1], strides = [1, 1]} : vector<24x11xf32> to vector<24x1xf32>
    %11 = vector.broadcast %10 : vector<24x1xf32> to vector<24x22xf32>
    %12 = arith.mulf %11, %9 : vector<24x22xf32>
    %c5_i32 = arith.constant 5 : i32
    %13 = tpu.dynamic_rotate %9 by %c5_i32 dim 0 : vector<24x22xf32>, i32 -> vector<24x22xf32>
    %14 = vector.extract_strided_slice %2 {offsets = [0, 0], sizes = [24, 1], strides = [1, 1]} : vector<24x11xf32> to vector<24x1xf32>
    %15 = vector.broadcast %14 : vector<24x1xf32> to vector<24x22xf32>
    %16 = arith.mulf %15, %13 : vector<24x22xf32>
    %17 = arith.addf %12, %16 : vector<24x22xf32>
    %c4_i32 = arith.constant 4 : i32
    %18 = tpu.dynamic_rotate %9 by %c4_i32 dim 0 : vector<24x22xf32>, i32 -> vector<24x22xf32>
    %19 = vector.extract_strided_slice %2 {offsets = [0, 1], sizes = [24, 1], strides = [1, 1]} : vector<24x11xf32> to vector<24x1xf32>
    %20 = vector.broadcast %19 : vector<24x1xf32> to vector<24x22xf32>
    %21 = arith.mulf %20, %18 : vector<24x22xf32>
    %22 = arith.addf %17, %21 : vector<24x22xf32>
    %c3_i32 = arith.constant 3 : i32
    %23 = tpu.dynamic_rotate %9 by %c3_i32 dim 0 : vector<24x22xf32>, i32 -> vector<24x22xf32>
    %24 = vector.extract_strided_slice %2 {offsets = [0, 2], sizes = [24, 1], strides = [1, 1]} : vector<24x11xf32> to vector<24x1xf32>
    %25 = vector.broadcast %24 : vector<24x1xf32> to vector<24x22xf32>
    %26 = arith.mulf %25, %23 : vector<24x22xf32>
    %27 = arith.addf %22, %26 : vector<24x22xf32>
    %c2_i32 = arith.constant 2 : i32
    %28 = tpu.dynamic_rotate %9 by %c2_i32 dim 0 : vector<24x22xf32>, i32 -> vector<24x22xf32>
    %29 = vector.extract_strided_slice %2 {offsets = [0, 3], sizes = [24, 1], strides = [1, 1]} : vector<24x11xf32> to vector<24x1xf32>
    %30 = vector.broadcast %29 : vector<24x1xf32> to vector<24x22xf32>
    %31 = arith.mulf %30, %28 : vector<24x22xf32>
    %32 = arith.addf %27, %31 : vector<24x22xf32>
    %c1_i32 = arith.constant 1 : i32
    %33 = tpu.dynamic_rotate %9 by %c1_i32 dim 0 : vector<24x22xf32>, i32 -> vector<24x22xf32>
    %34 = vector.extract_strided_slice %2 {offsets = [0, 4], sizes = [24, 1], strides = [1, 1]} : vector<24x11xf32> to vector<24x1xf32>
    %35 = vector.broadcast %34 : vector<24x1xf32> to vector<24x22xf32>
    %36 = arith.mulf %35, %33 : vector<24x22xf32>
    %37 = arith.addf %32, %36 : vector<24x22xf32>
    %c23_i32 = arith.constant 23 : i32
    %38 = tpu.dynamic_rotate %9 by %c23_i32 dim 0 : vector<24x22xf32>, i32 -> vector<24x22xf32>
    %39 = vector.extract_strided_slice %2 {offsets = [0, 6], sizes = [24, 1], strides = [1, 1]} : vector<24x11xf32> to vector<24x1xf32>
    %40 = vector.broadcast %39 : vector<24x1xf32> to vector<24x22xf32>
    %41 = arith.mulf %40, %38 : vector<24x22xf32>
    %42 = arith.addf %37, %41 : vector<24x22xf32>
    %c22_i32 = arith.constant 22 : i32
    %43 = tpu.dynamic_rotate %9 by %c22_i32 dim 0 : vector<24x22xf32>, i32 -> vector<24x22xf32>
    %44 = vector.extract_strided_slice %2 {offsets = [0, 7], sizes = [24, 1], strides = [1, 1]} : vector<24x11xf32> to vector<24x1xf32>
    %45 = vector.broadcast %44 : vector<24x1xf32> to vector<24x22xf32>
    %46 = arith.mulf %45, %43 : vector<24x22xf32>
    %47 = arith.addf %42, %46 : vector<24x22xf32>
    %c21_i32 = arith.constant 21 : i32
    %48 = tpu.dynamic_rotate %9 by %c21_i32 dim 0 : vector<24x22xf32>, i32 -> vector<24x22xf32>
    %49 = vector.extract_strided_slice %2 {offsets = [0, 8], sizes = [24, 1], strides = [1, 1]} : vector<24x11xf32> to vector<24x1xf32>
    %50 = vector.broadcast %49 : vector<24x1xf32> to vector<24x22xf32>
    %51 = arith.mulf %50, %48 : vector<24x22xf32>
    %52 = arith.addf %47, %51 : vector<24x22xf32>
    %c20_i32 = arith.constant 20 : i32
    %53 = tpu.dynamic_rotate %9 by %c20_i32 dim 0 : vector<24x22xf32>, i32 -> vector<24x22xf32>
    %54 = vector.extract_strided_slice %2 {offsets = [0, 9], sizes = [24, 1], strides = [1, 1]} : vector<24x11xf32> to vector<24x1xf32>
    %55 = vector.broadcast %54 : vector<24x1xf32> to vector<24x22xf32>
    %56 = arith.mulf %55, %53 : vector<24x22xf32>
    %57 = arith.addf %52, %56 : vector<24x22xf32>
    %c19_i32 = arith.constant 19 : i32
    %58 = tpu.dynamic_rotate %9 by %c19_i32 dim 0 : vector<24x22xf32>, i32 -> vector<24x22xf32>
    %59 = vector.extract_strided_slice %2 {offsets = [0, 10], sizes = [24, 1], strides = [1, 1]} : vector<24x11xf32> to vector<24x1xf32>
    %60 = vector.broadcast %59 : vector<24x1xf32> to vector<24x22xf32>
    %61 = arith.mulf %60, %58 : vector<24x22xf32>
    %62 = arith.addf %57, %61 : vector<24x22xf32>
    %c0_9 = arith.constant 0 : index
    %c0_10 = arith.constant 0 : index
    %63 = vector.load %arg6[%c0_9, %c0_10] : memref<1x22xf32, #tpu.memory_space<vmem>>, vector<1x22xf32>
    %64 = vector.broadcast %63 : vector<1x22xf32> to vector<24x22xf32>
    %65 = arith.addf %62, %64 : vector<24x22xf32>
    %cst_11 = arith.constant 0.000000e+00 : f32
    %66 = vector.broadcast %cst_11 : f32 to vector<24x22xf32>
    %67 = arith.maximumf %65, %66 : vector<24x22xf32>
    %c0_12 = arith.constant 0 : index
    %c0_13 = arith.constant 0 : index
    %68 = vector.load %arg7[%c0_12, %c0_13] : memref<22x32xf32, #tpu.memory_space<vmem>>, vector<22x32xf32>
    %cst_14 = arith.constant dense<0.000000e+00> : vector<24x32xf32>
    %69 = tpu.matmul %67, %68, %cst_14 {dimension_numbers = #tpu.dot_dimension_numbers<[1], [0], [0], [1], [0, 0, 1, 1], [], []>} : vector<24x22xf32>, vector<22x32xf32>, vector<24x32xf32> -> vector<24x32xf32>
    %c0_15 = arith.constant 0 : index
    %c0_16 = arith.constant 0 : index
    %70 = vector.load %arg8[%c0_15, %c0_16] : memref<21x32xf32, #tpu.memory_space<vmem>>, vector<21x32xf32>
    %cst_17 = arith.constant dense<0.000000e+00> : vector<24x32xf32>
    %71 = tpu.matmul %0, %70, %cst_17 {dimension_numbers = #tpu.dot_dimension_numbers<[1], [0], [0], [1], [0, 0, 1, 1], [], []>} : vector<24x21xf32>, vector<21x32xf32>, vector<24x32xf32> -> vector<24x32xf32>
    %72 = arith.addf %69, %71 : vector<24x32xf32>
    %c0_18 = arith.constant 0 : index
    %c0_19 = arith.constant 0 : index
    %73 = vector.load %arg9[%c0_18, %c0_19] : memref<1x32xf32, #tpu.memory_space<vmem>>, vector<1x32xf32>
    %74 = vector.broadcast %1 : vector<24x1xf32> to vector<24x32xf32>
    %75 = vector.broadcast %73 : vector<1x32xf32> to vector<24x32xf32>
    %76 = arith.mulf %74, %75 : vector<24x32xf32>
    %77 = arith.addf %72, %76 : vector<24x32xf32>
    %c0_20 = arith.constant 0 : index
    %c0_21 = arith.constant 0 : index
    %78 = vector.load %arg10[%c0_20, %c0_21] : memref<1x32xf32, #tpu.memory_space<vmem>>, vector<1x32xf32>
    %79 = vector.broadcast %78 : vector<1x32xf32> to vector<24x32xf32>
    %80 = arith.addf %77, %79 : vector<24x32xf32>
    %cst_22 = arith.constant 0.000000e+00 : f32
    %81 = vector.broadcast %cst_22 : f32 to vector<24x32xf32>
    %82 = arith.maximumf %80, %81 : vector<24x32xf32>
    %c0_23 = arith.constant 0 : index
    %c0_24 = arith.constant 0 : index
    %83 = vector.load %arg11[%c0_23, %c0_24] : memref<32x32xf32, #tpu.memory_space<vmem>>, vector<32x32xf32>
    %cst_25 = arith.constant dense<0.000000e+00> : vector<24x32xf32>
    %84 = tpu.matmul %82, %83, %cst_25 {dimension_numbers = #tpu.dot_dimension_numbers<[1], [0], [0], [1], [0, 0, 1, 1], [], []>} : vector<24x32xf32>, vector<32x32xf32>, vector<24x32xf32> -> vector<24x32xf32>
    %c0_26 = arith.constant 0 : index
    %c0_27 = arith.constant 0 : index
    %85 = vector.load %arg12[%c0_26, %c0_27] : memref<1x32xf32, #tpu.memory_space<vmem>>, vector<1x32xf32>
    %86 = vector.broadcast %85 : vector<1x32xf32> to vector<24x32xf32>
    %87 = arith.addf %84, %86 : vector<24x32xf32>
    %cst_28 = arith.constant 0.000000e+00 : f32
    %88 = vector.broadcast %cst_28 : f32 to vector<24x32xf32>
    %89 = arith.maximumf %87, %88 : vector<24x32xf32>
    %c0_29 = arith.constant 0 : index
    %c0_30 = arith.constant 0 : index
    %90 = vector.load %arg13[%c0_29, %c0_30] : memref<32x1xf32, #tpu.memory_space<vmem>>, vector<32x1xf32>
    %cst_31 = arith.constant dense<0.000000e+00> : vector<24x1xf32>
    %91 = tpu.matmul %89, %90, %cst_31 {dimension_numbers = #tpu.dot_dimension_numbers<[1], [0], [0], [1], [0, 0, 1, 1], [], []>} : vector<24x32xf32>, vector<32x1xf32>, vector<24x1xf32> -> vector<24x1xf32>
    %c0_32 = arith.constant 0 : index
    %c0_33 = arith.constant 0 : index
    %92 = vector.load %arg14[%c0_32, %c0_33] : memref<24x1xf32, #tpu.memory_space<vmem>>, vector<24x1xf32>
    tpu.vector_store %arg14[%c0_32, %c0_33], %91 {strides = array<i32>} : memref<24x1xf32, #tpu.memory_space<vmem>>, vector<24x1xf32>,
    return
  }
  func.func @transform_0(%arg0: i32) -> (i32, i32) {
    %c0_i32 = arith.constant 0 : i32
    %c0_i32_0 = arith.constant 0 : i32
    return %arg0, %c0_i32 : i32, i32
  }
  func.func @transform_1(%arg0: i32) -> (i32, i32) {
    %c0_i32 = arith.constant 0 : i32
    %c0_i32_0 = arith.constant 0 : i32
    return %arg0, %c0_i32 : i32, i32
  }
  func.func @transform_2(%arg0: i32) -> (i32, i32) {
    %c0_i32 = arith.constant 0 : i32
    %c0_i32_0 = arith.constant 0 : i32
    return %arg0, %c0_i32 : i32, i32
  }
  func.func @transform_3(%arg0: i32) -> (i32, i32) {
    %c0_i32 = arith.constant 0 : i32
    %c0_i32_0 = arith.constant 0 : i32
    %c0_i32_1 = arith.constant 0 : i32
    return %c0_i32, %c0_i32_0 : i32, i32
  }
  func.func @transform_4(%arg0: i32) -> (i32, i32) {
    %c0_i32 = arith.constant 0 : i32
    %c0_i32_0 = arith.constant 0 : i32
    %c0_i32_1 = arith.constant 0 : i32
    return %c0_i32, %c0_i32_0 : i32, i32
  }
  func.func @transform_5(%arg0: i32) -> (i32, i32) {
    %c0_i32 = arith.constant 0 : i32
    %c0_i32_0 = arith.constant 0 : i32
    %c0_i32_1 = arith.constant 0 : i32
    return %c0_i32, %c0_i32_0 : i32, i32
  }
  func.func @transform_6(%arg0: i32) -> (i32, i32) {
    %c0_i32 = arith.constant 0 : i32
    %c0_i32_0 = arith.constant 0 : i32
    %c0_i32_1 = arith.constant 0 : i32
    return %c0_i32, %c0_i32_0 : i32, i32
  }
  func.func @transform_7(%arg0: i32) -> (i32, i32) {
    %c0_i32 = arith.constant 0 : i32
    %c0_i32_0 = arith.constant 0 : i32
    %c0_i32_1 = arith.constant 0 : i32
    return %c0_i32, %c0_i32_0 : i32, i32
  }
  func.func @transform_8(%arg0: i32) -> (i32, i32) {
    %c0_i32 = arith.constant 0 : i32
    %c0_i32_0 = arith.constant 0 : i32
    %c0_i32_1 = arith.constant 0 : i32
    return %c0_i32, %c0_i32_0 : i32, i32
  }
  func.func @transform_9(%arg0: i32) -> (i32, i32) {
    %c0_i32 = arith.constant 0 : i32
    %c0_i32_0 = arith.constant 0 : i32
    %c0_i32_1 = arith.constant 0 : i32
    return %c0_i32, %c0_i32_0 : i32, i32
  }
  func.func @transform_10(%arg0: i32) -> (i32, i32) {
    %c0_i32 = arith.constant 0 : i32
    %c0_i32_0 = arith.constant 0 : i32
    %c0_i32_1 = arith.constant 0 : i32
    return %c0_i32, %c0_i32_0 : i32, i32
  }
  func.func @transform_11(%arg0: i32) -> (i32, i32) {
    %c0_i32 = arith.constant 0 : i32
    %c0_i32_0 = arith.constant 0 : i32
    %c0_i32_1 = arith.constant 0 : i32
    return %c0_i32, %c0_i32_0 : i32, i32
  }
  func.func @transform_12(%arg0: i32) -> (i32, i32) {
    %c0_i32 = arith.constant 0 : i32
    %c0_i32_0 = arith.constant 0 : i32
    %c0_i32_1 = arith.constant 0 : i32
    return %c0_i32, %c0_i32_0 : i32, i32
  }
  func.func @transform_13(%arg0: i32) -> (i32, i32) {
    %c0_i32 = arith.constant 0 : i32
    %c0_i32_0 = arith.constant 0 : i32
    return %arg0, %c0_i32 : i32, i32
  }
}

</mosaic_0001>

<llo_original>
// kernel: tpu_custom_call.1
$region0: #{tpu_custom_call.1}
  #allocation0 [shape = 'u32[]', space=smem, size = 0x4, offset = 0x4, fixed_abs, tag = 'smem constant byte address 0x4 - core index']
  #allocation1 [shape = 'u32[72,128]{1,0:T(1,128)}', space=vmem, size = 0x9000, scoped, tag = 'internal scratch']
  %s0 = inlined_call_operand.vmem [shape: f32[24,21], index: 0, kind: input, shape index: {}]
  %s1 = inlined_call_operand.vmem [shape: f32[24,1], index: 1, kind: input, shape index: {}]
  %s2 = inlined_call_operand.vmem [shape: f32[24,11], index: 2, kind: input, shape index: {}]
  %s3 = inlined_call_operand.vmem [shape: f32[21,22], index: 3, kind: input, shape index: {}]
  %s4 = inlined_call_operand.vmem [shape: f32[1,22], index: 4, kind: input, shape index: {}]
  %s5 = inlined_call_operand.vmem [shape: f32[1,22], index: 5, kind: input, shape index: {}]
  %s6 = inlined_call_operand.hbm [shape: f32[22,32], index: 6, kind: input, shape index: {}]
  %s7 = inlined_call_operand.hbm [shape: f32[21,32], index: 7, kind: input, shape index: {}]
  %s8 = inlined_call_operand.vmem [shape: f32[1,32], index: 8, kind: input, shape index: {}]
  %s9 = inlined_call_operand.vmem [shape: f32[1,32], index: 9, kind: input, shape index: {}]
  %s10 = inlined_call_operand.vmem [shape: f32[32,32], index: 10, kind: input, shape index: {}]
  %s11 = inlined_call_operand.vmem [shape: f32[1,32], index: 11, kind: input, shape index: {}]
  %s12 = inlined_call_operand.vmem [shape: f32[32,1], index: 12, kind: input, shape index: {}]
  %s13 = inlined_call_operand.vmem [shape: f32[24,1], index: 13, kind: output, shape index: {}]
  %s14 = sld [smem:[#allocation0]]
  $region70: #{tpu_custom_call.1} parent=0
    _
  %s16 = ssub.s32 1, %s14
  %s17 = scalar_select 0, %s16, %s14
  $region1: #{tpu_custom_call.1} parent=0
    #allocation2 [shape = 'u8[12288]{0}', space=vmem, size = 0x3000, scoped, tag = 'input window, operand 6, single buffered']
    #allocation3 [shape = 's32[1]{0}', space=sflag, size = 0x4, scoped, tag = 'scoped memory for tpu_custom_call.1']
    #allocation4 [shape = 'u8[12288]{0}', space=vmem, size = 0x3000, scoped, tag = 'input window, operand 7, single buffered']
    #allocation5 [shape = 's32[1]{0}', space=sflag, size = 0x4, scoped, tag = 'scoped memory for tpu_custom_call.1']
    %18 = vsyncpa [#allocation3], 0
    %19 = vsyncpa [#allocation5], 0
    // Predicated region
    $region2: #{tpu_custom_call.1} parent=1 // pred_check
      _
    $region3: #{tpu_custom_call.1} parent=1 // pred_check_branch
      %21 = sbr.rel (0) target = $region5
    $region4: #{tpu_custom_call.1} parent=1 // pred_region
      _
    $region5: #{tpu_custom_call.1} parent=1 // pred_fallthru
      _
    // Predicated region
    $region6: #{tpu_custom_call.1} parent=1 // pred_check
      _
    $region7: #{tpu_custom_call.1} parent=1 // pred_check_branch
      %23 = sbr.rel (0) target = $region9
    $region8: #{tpu_custom_call.1} parent=1 // pred_region
      _
    $region9: #{tpu_custom_call.1} parent=1 // pred_fallthru
      _
    // Predicated region
    $region10: #{tpu_custom_call.1} parent=1 // pred_check
      _
    $region11: #{tpu_custom_call.1} parent=1 // pred_check_branch
      %25 = sbr.rel (0) target = $region13
    $region12: #{tpu_custom_call.1} parent=1 // pred_region
      _
    $region13: #{tpu_custom_call.1} parent=1 // pred_fallthru
      _
    // Predicated region
    $region14: #{tpu_custom_call.1} parent=1 // pred_check
      _
    $region15: #{tpu_custom_call.1} parent=1 // pred_check_branch
      %27 = sbr.rel (0) target = $region17
    $region16: #{tpu_custom_call.1} parent=1 // pred_region
      _
    $region17: #{tpu_custom_call.1} parent=1 // pred_fallthru
      _
    // Predicated region
    $region18: #{tpu_custom_call.1} parent=1 // pred_check
      _
    $region19: #{tpu_custom_call.1} parent=1 // pred_check_branch
      %29 = sbr.rel (0) target = $region21
    $region20: #{tpu_custom_call.1} parent=1 // pred_region
      _
    $region21: #{tpu_custom_call.1} parent=1 // pred_fallthru
      _
    // Predicated region
    $region22: #{tpu_custom_call.1} parent=1 // pred_check
      _
    $region23: #{tpu_custom_call.1} parent=1 // pred_check_branch
      %31 = sbr.rel (0) target = $region25
    $region24: #{tpu_custom_call.1} parent=1 // pred_region
      _
    $region25: #{tpu_custom_call.1} parent=1 // pred_fallthru
      _
    // Predicated region
    $region26: #{tpu_custom_call.1} parent=1 // pred_check
      _
    $region27: #{tpu_custom_call.1} parent=1 // pred_check_branch
      %33 = sbr.rel (0) target = $region29
    $region28: #{tpu_custom_call.1} parent=1 // pred_region
      %35 = vsyncadd [#allocation3], 0
      %s36 = sshll.u32 %s6, 4
      %s37 = int_to_ptr.hbm [resolvable:$true] %s36
      %s38 = sshll.u32 [#allocation2], 4
      %s39 = int_to_ptr.vmem [resolvable:$true] %s38
      %44 = dma.hbm_to_vmem [thread:$0]  %s37, 384, %s39, [#allocation3], 128, 128, 8
    $region29: #{tpu_custom_call.1} parent=1 // pred_fallthru
      _
    // Predicated region
    $region30: #{tpu_custom_call.1} parent=1 // pred_check
      _
    $region31: #{tpu_custom_call.1} parent=1 // pred_check_branch
      %46 = sbr.rel (0) target = $region33
    $region32: #{tpu_custom_call.1} parent=1 // pred_region
      %48 = vsyncadd [#allocation5], 0
      %s49 = sshll.u32 %s7, 4
      %s50 = int_to_ptr.hbm [resolvable:$true] %s49
      %s51 = sshll.u32 [#allocation4], 4
      %s52 = int_to_ptr.vmem [resolvable:$true] %s51
      %57 = dma.hbm_to_vmem [thread:$0]  %s50, 384, %s52, [#allocation5], 128, 128, 8
    $region33: #{tpu_custom_call.1} parent=1 // pred_fallthru
      _
    // Predicated region
    $region34: #{tpu_custom_call.1} parent=1 // pred_check
      _
    $region35: #{tpu_custom_call.1} parent=1 // pred_check_branch
      %59 = sbr.rel (0) target = $region37
    $region36: #{tpu_custom_call.1} parent=1 // pred_region
      _
    $region37: #{tpu_custom_call.1} parent=1 // pred_fallthru
      _
    // Predicated region
    $region38: #{tpu_custom_call.1} parent=1 // pred_check
      _
    $region39: #{tpu_custom_call.1} parent=1 // pred_check_branch
      %61 = sbr.rel (0) target = $region41
    $region40: #{tpu_custom_call.1} parent=1 // pred_region
      _
    $region41: #{tpu_custom_call.1} parent=1 // pred_fallthru
      _
    // Predicated region
    $region42: #{tpu_custom_call.1} parent=1 // pred_check
      _
    $region43: #{tpu_custom_call.1} parent=1 // pred_check_branch
      %63 = sbr.rel (0) target = $region45
    $region44: #{tpu_custom_call.1} parent=1 // pred_region
      _
    $region45: #{tpu_custom_call.1} parent=1 // pred_fallthru
      _
    // Predicated region
    $region46: #{tpu_custom_call.1} parent=1 // pred_check
      _
    $region47: #{tpu_custom_call.1} parent=1 // pred_check_branch
      %65 = sbr.rel (0) target = $region49
    $region48: #{tpu_custom_call.1} parent=1 // pred_region
      _
    $region49: #{tpu_custom_call.1} parent=1 // pred_fallthru
      _
    // Predicated region
    $region50: #{tpu_custom_call.1} parent=1 // pred_check
      _
    $region51: #{tpu_custom_call.1} parent=1 // pred_check_branch
      %67 = sbr.rel (0) target = $region53
    $region52: #{tpu_custom_call.1} parent=1 // pred_region
      _
    $region53: #{tpu_custom_call.1} parent=1 // pred_fallthru
      _
    // Predicated region
    $region54: #{tpu_custom_call.1} parent=1 // pred_check
      _
    $region55: #{tpu_custom_call.1} parent=1 // pred_check_branch
      %69 = sbr.rel (0) target = $region57
    $region56: #{tpu_custom_call.1} parent=1 // pred_region
      %71 = dma.done [#allocation3], 384
    $region57: #{tpu_custom_call.1} parent=1 // pred_fallthru
      _
    // Predicated region
    $region58: #{tpu_custom_call.1} parent=1 // pred_check
      _
    $region59: #{tpu_custom_call.1} parent=1 // pred_check_branch
      %73 = sbr.rel (0) target = $region61
    $region60: #{tpu_custom_call.1} parent=1 // pred_region
      %75 = dma.done [#allocation5], 384
    $region61: #{tpu_custom_call.1} parent=1 // pred_fallthru
      _
    %v76 = vld [vmem:[%s0] sm:$0xff]
    %v77 = vld [vmem:[%s0 + $0x8] sm:$0xff]
    %v78 = vld [vmem:[%s0 + $0x10] sm:$0xff]
    %v79 = vld [vmem:[%s1] sm:$0xff]
    %v80 = vld [vmem:[%s1 + $0x8] sm:$0xff]
    %v81 = vld [vmem:[%s1 + $0x10] sm:$0xff]
    %v82 = vld [vmem:[%s2] sm:$0xff]
    %v83 = vld [vmem:[%s2 + $0x8] sm:$0xff]
    %v84 = vld [vmem:[%s2 + $0x10] sm:$0xff]
    %v85 = vld [vmem:[%s3] sm:$0xff]
    %v86 = vld [vmem:[%s3 + $0x8] sm:$0xff]
    %v87 = vld [vmem:[%s3 + $0x10] sm:$0x1f]
    %v88 = vld [vmem:[%s4] sm:$0x1]
    %90 = vset.pattern.permute.xlu0 0
    %91 = vperm.xlu0 %90, %v79
    %v92 = vpop.permute.xlu0 %91
    %95 = vset.pattern.permute.xlu0 0
    %96 = vperm.xlu0 %95, %v80
    %v97 = vpop.permute.xlu0 %96
    %100 = vset.pattern.permute.xlu0 0
    %101 = vperm.xlu0 %100, %v81
    %v102 = vpop.permute.xlu0 %101
    %v105 = vperm.slane %v88, 0
    %v107 = vmul.f32 %v92, %v105
    %v108 = vmul.f32 %v97, %v105
    %v109 = vmul.f32 %v102, %v105
    %vm110 = vcmask 171008
    %v112 = vsel %vm110, %v76, 0
    %v115 = vsel %vm110, %v77, 0
    %v118 = vsel %vm110, %v78, 0
    %vm120 = vcmask 1044480
    %v122 = vsel %vm120, %v87, 0
    %124 = vmatpush.msra.mxu0 0.0
    %125 = vmatpush.msra.mxu0 0.0
    %126 = vmatpush.msra.mxu0 0.0
    %127 = vmatpush.msra.mxu0 0.0
    %128 = vmatpush.msra.mxu0 0.0
    %129 = vmatpush.msra.mxu0 0.0
    %130 = vmatpush.msra.mxu0 0.0
    %131 = vmatpush.msra.mxu0 0.0
    %132 = vmatpush.msra.mxu0 0.0
    %133 = vmatpush.msra.mxu0 0.0
    %134 = vmatpush.msra.mxu0 0.0
    %135 = vmatpush.msra.mxu0 0.0
    %136 = vmatpush.msra.mxu0 0.0
    %137 = vmatpush.msra.mxu0 %v122
    %138 = vmatpush.msra.mxu0 %v86
    %139 = vmatpush.msra.mxu0 %v85
    %140 = vmatmul.f32.gmra.mxu0 %v112
    %v141 = vpop.f32.mrf.mxu0
    %v142 = vadd.f32 %v107, %v141
    %143 = vmatmul.f32.gmra.mxu0 %v115
    %v144 = vpop.f32.mrf.mxu0
    %v145 = vadd.f32 %v108, %v144
    %146 = vmatmul.f32.gmra.mxu0 %v118
    %v147 = vpop.f32.mrf.mxu0
    %v148 = vadd.f32 %v109, %v147
    %149 = vdwg.mxu0
    %151 = vset.pattern.permute.xlu0 5
    %152 = vperm.xlu0 %151, %v82
    %v153 = vpop.permute.xlu0 %152
    %156 = vset.pattern.permute.xlu0 5
    %157 = vperm.xlu0 %156, %v83
    %v158 = vpop.permute.xlu0 %157
    %161 = vset.pattern.permute.xlu0 5
    %162 = vperm.xlu0 %161, %v84
    %v163 = vpop.permute.xlu0 %162
    %v165 = vmul.f32 %v153, %v142
    %v166 = vmul.f32 %v158, %v145
    %v167 = vmul.f32 %v163, %v148
    %v168 = vrot.slane %v142, 3
    %v169 = vrot.slane %v145, 3
    %v170 = vrot.slane %v148, 3
    %v171 = vlaneseq
    %v172 = vshrl.u32 %v171, 7
    %vm173 = vcmp.lt.s32.totalorder %v172, 5
    %v174 = vsel %vm173, %v169, %v170
    %v175 = vsel %vm173, %v168, %v169
    %v176 = vsel %vm173, %v170, %v168
    %177 = vset.pattern.permute.xlu0 0
    %178 = vperm.xlu0 %177, %v82
    %v179 = vpop.permute.xlu0 %178
    %181 = vset.pattern.permute.xlu0 0
    %182 = vperm.xlu0 %181, %v83
    %v183 = vpop.permute.xlu0 %182
    %185 = vset.pattern.permute.xlu0 0
    %186 = vperm.xlu0 %185, %v84
    %v187 = vpop.permute.xlu0 %186
    %v189 = vmul.f32 %v179, %v176
    %v190 = vmul.f32 %v183, %v175
    %v191 = vmul.f32 %v187, %v174
    %v192 = vadd.f32 %v165, %v189
    %v193 = vadd.f32 %v166, %v190
    %v194 = vadd.f32 %v167, %v191
    %v195 = vrot.slane %v142, 4
    %v196 = vrot.slane %v145, 4
    %v197 = vrot.slane %v148, 4
    %vm198 = vcmp.lt.s32.totalorder %v172, 4
    %v199 = vsel %vm198, %v196, %v197
    %v200 = vsel %vm198, %v195, %v196
    %v201 = vsel %vm198, %v197, %v195
    %202 = vset.pattern.permute.xlu0 1
    %203 = vperm.xlu0 %202, %v82
    %v204 = vpop.permute.xlu0 %203
    %206 = vset.pattern.permute.xlu0 1
    %207 = vperm.xlu0 %206, %v83
    %v208 = vpop.permute.xlu0 %207
    %210 = vset.pattern.permute.xlu0 1
    %211 = vperm.xlu0 %210, %v84
    %v212 = vpop.permute.xlu0 %211
    %v214 = vmul.f32 %v204, %v201
    %v215 = vmul.f32 %v208, %v200
    %v216 = vmul.f32 %v212, %v199
    %v217 = vadd.f32 %v192, %v214
    %v218 = vadd.f32 %v193, %v215
    %v219 = vadd.f32 %v194, %v216
    %v220 = vrot.slane %v142, 5
    %v221 = vrot.slane %v145, 5
    %v222 = vrot.slane %v148, 5
    %vm223 = vcmp.lt.s32.totalorder %v172, 3
    %v224 = vsel %vm223, %v221, %v222
    %v225 = vsel %vm223, %v220, %v221
    %v226 = vsel %vm223, %v222, %v220
    %227 = vset.pattern.permute.xlu0 2
    %228 = vperm.xlu0 %227, %v82
    %v229 = vpop.permute.xlu0 %228
    %231 = vset.pattern.permute.xlu0 2
    %232 = vperm.xlu0 %231, %v83
    %v233 = vpop.permute.xlu0 %232
    %235 = vset.pattern.permute.xlu0 2
    %236 = vperm.xlu0 %235, %v84
    %v237 = vpop.permute.xlu0 %236
    %v239 = vmul.f32 %v229, %v226
    %v240 = vmul.f32 %v233, %v225
    %v241 = vmul.f32 %v237, %v224
    %v242 = vadd.f32 %v217, %v239
    %v243 = vadd.f32 %v218, %v240
    %v244 = vadd.f32 %v219, %v241
    %v245 = vrot.slane %v142, 6
    %v246 = vrot.slane %v145, 6
    %v247 = vrot.slane %v148, 6
    %vm248 = vcmp.lt.s32.totalorder %v172, 2
    %v249 = vsel %vm248, %v246, %v247
    %v250 = vsel %vm248, %v245, %v246
    %v251 = vsel %vm248, %v247, %v245
    %252 = vset.pattern.permute.xlu0 3
    %253 = vperm.xlu0 %252, %v82
    %v254 = vpop.permute.xlu0 %253
    %256 = vset.pattern.permute.xlu0 3
    %257 = vperm.xlu0 %256, %v83
    %v258 = vpop.permute.xlu0 %257
    %260 = vset.pattern.permute.xlu0 3
    %261 = vperm.xlu0 %260, %v84
    %v262 = vpop.permute.xlu0 %261
    %v264 = vmul.f32 %v254, %v251
    %v265 = vmul.f32 %v258, %v250
    %v266 = vmul.f32 %v262, %v249
    %v267 = vadd.f32 %v242, %v264
    %v268 = vadd.f32 %v243, %v265
    %v269 = vadd.f32 %v244, %v266
    %v270 = vrot.slane %v142, 7
    %v271 = vrot.slane %v145, 7
    %v272 = vrot.slane %v148, 7
    %vm273 = vcmp.lt.s32.totalorder %v172, 1
    %v274 = vsel %vm273, %v271, %v272
    %v275 = vsel %vm273, %v270, %v271
    %v276 = vsel %vm273, %v272, %v270
    %277 = vset.pattern.permute.xlu0 4
    %278 = vperm.xlu0 %277, %v82
    %v279 = vpop.permute.xlu0 %278
    %281 = vset.pattern.permute.xlu0 4
    %282 = vperm.xlu0 %281, %v83
    %v283 = vpop.permute.xlu0 %282
    %285 = vset.pattern.permute.xlu0 4
    %286 = vperm.xlu0 %285, %v84
    %v287 = vpop.permute.xlu0 %286
    %v289 = vmul.f32 %v279, %v276
    %v290 = vmul.f32 %v283, %v275
    %v291 = vmul.f32 %v287, %v274
    %v292 = vadd.f32 %v267, %v289
    %v293 = vadd.f32 %v268, %v290
    %v294 = vadd.f32 %v269, %v291
    %v295 = vrot.slane %v142, 1
    %v296 = vrot.slane %v145, 1
    %v297 = vrot.slane %v148, 1
    %vm298 = vcmp.lt.s32.totalorder %v172, 7
    %v299 = vsel %vm298, %v296, %v297
    %v300 = vsel %vm298, %v295, %v296
    %v301 = vsel %vm298, %v297, %v295
    %302 = vset.pattern.permute.xlu0 6
    %303 = vperm.xlu0 %302, %v82
    %v304 = vpop.permute.xlu0 %303
    %306 = vset.pattern.permute.xlu0 6
    %307 = vperm.xlu0 %306, %v83
    %v308 = vpop.permute.xlu0 %307
    %310 = vset.pattern.permute.xlu0 6
    %311 = vperm.xlu0 %310, %v84
    %v312 = vpop.permute.xlu0 %311
    %v314 = vmul.f32 %v304, %v300
    %v315 = vmul.f32 %v308, %v299
    %v316 = vmul.f32 %v312, %v301
    %v317 = vadd.f32 %v292, %v314
    %v318 = vadd.f32 %v293, %v315
    %v319 = vadd.f32 %v294, %v316
    %v320 = vrot.slane %v142, 2
    %v321 = vrot.slane %v145, 2
    %v322 = vrot.slane %v148, 2
    %vm323 = vcmp.lt.s32.totalorder %v172, 6
    %v324 = vsel %vm323, %v321, %v322
    %v325 = vsel %vm323, %v320, %v321
    %v326 = vsel %vm323, %v322, %v320
    %327 = vset.pattern.permute.xlu0 7
    %328 = vperm.xlu0 %327, %v82
    %v329 = vpop.permute.xlu0 %328
    %331 = vset.pattern.permute.xlu0 7
    %332 = vperm.xlu0 %331, %v83
    %v333 = vpop.permute.xlu0 %332
    %335 = vset.pattern.permute.xlu0 7
    %336 = vperm.xlu0 %335, %v84
    %v337 = vpop.permute.xlu0 %336
    %v339 = vmul.f32 %v329, %v325
    %v340 = vmul.f32 %v333, %v324
    %v341 = vmul.f32 %v337, %v326
    %v342 = vadd.f32 %v317, %v339
    %v343 = vadd.f32 %v318, %v340
    %v344 = vadd.f32 %v319, %v341
    %345 = vset.pattern.permute.xlu0 8
    %346 = vperm.xlu0 %345, %v82
    %v347 = vpop.permute.xlu0 %346
    %349 = vset.pattern.permute.xlu0 8
    %350 = vperm.xlu0 %349, %v83
    %v351 = vpop.permute.xlu0 %350
    %353 = vset.pattern.permute.xlu0 8
    %354 = vperm.xlu0 %353, %v84
    %v355 = vpop.permute.xlu0 %354
    %v357 = vmul.f32 %v347, %v175
    %v358 = vmul.f32 %v351, %v174
    %v359 = vmul.f32 %v355, %v176
    %v360 = vadd.f32 %v342, %v357
    %v361 = vadd.f32 %v343, %v358
    %v362 = vadd.f32 %v344, %v359
    %363 = vset.pattern.permute.xlu0 9
    %364 = vperm.xlu0 %363, %v82
    %v365 = vpop.permute.xlu0 %364
    %367 = vset.pattern.permute.xlu0 9
    %368 = vperm.xlu0 %367, %v83
    %v369 = vpop.permute.xlu0 %368
    %371 = vset.pattern.permute.xlu0 9
    %372 = vperm.xlu0 %371, %v84
    %v373 = vpop.permute.xlu0 %372
    %v375 = vmul.f32 %v365, %v200
    %v376 = vmul.f32 %v369, %v199
    %v377 = vmul.f32 %v373, %v201
    %v378 = vadd.f32 %v360, %v375
    %v379 = vadd.f32 %v361, %v376
    %v380 = vadd.f32 %v362, %v377
    %381 = vset.pattern.permute.xlu0 10
    %382 = vperm.xlu0 %381, %v82
    %v383 = vpop.permute.xlu0 %382
    %385 = vset.pattern.permute.xlu0 10
    %386 = vperm.xlu0 %385, %v83
    %v387 = vpop.permute.xlu0 %386
    %389 = vset.pattern.permute.xlu0 10
    %390 = vperm.xlu0 %389, %v84
    %v391 = vpop.permute.xlu0 %390
    %v393 = vmul.f32 %v383, %v225
    %v394 = vmul.f32 %v387, %v224
    %v395 = vmul.f32 %v391, %v226
    %v396 = vadd.f32 %v378, %v393
    %v397 = vadd.f32 %v379, %v394
    %v398 = vadd.f32 %v380, %v395
    %v399 = vld [vmem:[%s5] sm:$0x1]
    %v401 = vperm.slane %v399, 0
    %v403 = vadd.f32 %v396, %v401
    %v404 = vadd.f32 %v397, %v401
    %v405 = vadd.f32 %v398, %v401
    %v406 = vmax.f32 %v403, 0.0
    %v407 = vmax.f32 %v404, 0.0
    %v408 = vmax.f32 %v405, 0.0
    %v409 = vld [vmem:[#allocation2] sm:$0xff]
    %v410 = vld [vmem:[#allocation2 + $0x8] sm:$0xff]
    %v411 = vld [vmem:[#allocation2 + $0x10] sm:$0x3f]
    %v412 = vld [vmem:[#allocation4] sm:$0xff]
    %v413 = vld [vmem:[#allocation4 + $0x8] sm:$0xff]
    %v414 = vld [vmem:[#allocation4 + $0x10] sm:$0x1f]
    %v416 = vsel %vm120, %v414, 0
    %418 = vmatpush.msra.mxu0 0.0
    %419 = vmatpush.msra.mxu0 0.0
    %420 = vmatpush.msra.mxu0 0.0
    %421 = vmatpush.msra.mxu0 0.0
    %422 = vmatpush.msra.mxu0 0.0
    %423 = vmatpush.msra.mxu0 0.0
    %424 = vmatpush.msra.mxu0 0.0
    %425 = vmatpush.msra.mxu0 0.0
    %426 = vmatpush.msra.mxu0 0.0
    %427 = vmatpush.msra.mxu0 0.0
    %428 = vmatpush.msra.mxu0 0.0
    %429 = vmatpush.msra.mxu0 0.0
    %430 = vmatpush.msra.mxu0 0.0
    %431 = vmatpush.msra.mxu0 %v416
    %432 = vmatpush.msra.mxu0 %v413
    %433 = vmatpush.msra.mxu0 %v412
    %434 = vmatmul.f32.gmra.mxu0 %v112
    %v435 = vpop.f32.mrf.mxu0
    %v436 = vadd.f32 0.0, %v435
    %437 = vmatmul.f32.gmra.mxu0 %v115
    %v438 = vpop.f32.mrf.mxu0
    %v439 = vadd.f32 0.0, %v438
    %440 = vmatmul.f32.gmra.mxu0 %v118
    %v441 = vpop.f32.mrf.mxu0
    %v442 = vadd.f32 0.0, %v441
    %443 = vdwg.mxu0
    %vm444 = vcmask 179200
    %v446 = vsel %vm444, %v406, 0
    %v449 = vsel %vm444, %v407, 0
    %v452 = vsel %vm444, %v408, 0
    %vm454 = vcmask 1045504
    %v456 = vsel %vm454, %v411, 0
    %458 = vmatpush.msra.mxu0 0.0
    %459 = vmatpush.msra.mxu0 0.0
    %460 = vmatpush.msra.mxu0 0.0
    %461 = vmatpush.msra.mxu0 0.0
    %462 = vmatpush.msra.mxu0 0.0
    %463 = vmatpush.msra.mxu0 0.0
    %464 = vmatpush.msra.mxu0 0.0
    %465 = vmatpush.msra.mxu0 0.0
    %466 = vmatpush.msra.mxu0 0.0
    %467 = vmatpush.msra.mxu0 0.0
    %468 = vmatpush.msra.mxu0 0.0
    %469 = vmatpush.msra.mxu0 0.0
    %470 = vmatpush.msra.mxu0 0.0
    %471 = vmatpush.msra.mxu0 %v456
    %472 = vmatpush.msra.mxu0 %v410
    %473 = vmatpush.msra.mxu0 %v409
    %474 = vmatmul.f32.gmra.mxu0 %v446
    %v475 = vpop.f32.mrf.mxu0
    %v476 = vadd.f32 %v436, %v475
    %477 = vmatmul.f32.gmra.mxu0 %v449
    %v478 = vpop.f32.mrf.mxu0
    %v479 = vadd.f32 %v439, %v478
    %480 = vmatmul.f32.gmra.mxu0 %v452
    %v481 = vpop.f32.mrf.mxu0
    %v482 = vadd.f32 %v442, %v481
    %483 = vdwg.mxu0
    %v484 = vld [vmem:[%s8] sm:$0x1]
    %v486 = vperm.slane %v484, 0
    %v488 = vmul.f32 %v92, %v486
    %v489 = vmul.f32 %v97, %v486
    %v490 = vmul.f32 %v102, %v486
    %v491 = vadd.f32 %v476, %v488
    %v492 = vadd.f32 %v479, %v489
    %v493 = vadd.f32 %v482, %v490
    %v494 = vld [vmem:[%s9] sm:$0x1]
    %v496 = vperm.slane %v494, 0
    %v498 = vadd.f32 %v491, %v496
    %v499 = vadd.f32 %v492, %v496
    %v500 = vadd.f32 %v493, %v496
    %v501 = vmax.f32 %v498, 0.0
    %v502 = vmax.f32 %v499, 0.0
    %v503 = vmax.f32 %v500, 0.0
    %v504 = vld [vmem:[%s10] sm:$0xff]
    %v505 = vld [vmem:[%s10 + $0x8] sm:$0xff]
    %v506 = vld [vmem:[%s10 + $0x10] sm:$0xff]
    %v507 = vld [vmem:[%s10 + $0x18] sm:$0xff]
    %v508 = vld [vmem:[%s11] sm:$0x1]
    %v510 = vperm.slane %v508, 0
    %vm512 = vcmask 261120
    %v514 = vsel %vm512, %v501, 0
    %v517 = vsel %vm512, %v502, 0
    %v520 = vsel %vm512, %v503, 0
    %522 = vmatpush.msra.mxu0 0.0
    %523 = vmatpush.msra.mxu0 0.0
    %524 = vmatpush.msra.mxu0 0.0
    %525 = vmatpush.msra.mxu0 0.0
    %526 = vmatpush.msra.mxu0 0.0
    %527 = vmatpush.msra.mxu0 0.0
    %528 = vmatpush.msra.mxu0 0.0
    %529 = vmatpush.msra.mxu0 0.0
    %530 = vmatpush.msra.mxu0 0.0
    %531 = vmatpush.msra.mxu0 0.0
    %532 = vmatpush.msra.mxu0 0.0
    %533 = vmatpush.msra.mxu0 0.0
    %534 = vmatpush.msra.mxu0 %v507
    %535 = vmatpush.msra.mxu0 %v506
    %536 = vmatpush.msra.mxu0 %v505
    %537 = vmatpush.msra.mxu0 %v504
    %538 = vmatmul.f32.gmra.mxu0 %v514
    %v539 = vpop.f32.mrf.mxu0
    %v540 = vadd.f32 %v510, %v539
    %541 = vmatmul.f32.gmra.mxu0 %v517
    %v542 = vpop.f32.mrf.mxu0
    %v543 = vadd.f32 %v510, %v542
    %544 = vmatmul.f32.gmra.mxu0 %v520
    %v545 = vpop.f32.mrf.mxu0
    %v546 = vadd.f32 %v510, %v545
    %547 = vdwg.mxu0
    %v548 = vmax.f32 %v540, 0.0
    %v549 = vmax.f32 %v543, 0.0
    %v550 = vmax.f32 %v546, 0.0
    %v551 = vld [vmem:[%s12] sm:$0xff]
    %v552 = vld [vmem:[%s12 + $0x8] sm:$0xff]
    %v553 = vld [vmem:[%s12 + $0x10] sm:$0xff]
    %v554 = vld [vmem:[%s12 + $0x18] sm:$0xff]
    %v556 = vsel %vm512, %v548, 0
    %v559 = vsel %vm512, %v549, 0
    %v562 = vsel %vm512, %v550, 0
    %564 = vmatpush.msra.mxu0 0.0
    %565 = vmatpush.msra.mxu0 0.0
    %566 = vmatpush.msra.mxu0 0.0
    %567 = vmatpush.msra.mxu0 0.0
    %568 = vmatpush.msra.mxu0 0.0
    %569 = vmatpush.msra.mxu0 0.0
    %570 = vmatpush.msra.mxu0 0.0
    %571 = vmatpush.msra.mxu0 0.0
    %572 = vmatpush.msra.mxu0 0.0
    %573 = vmatpush.msra.mxu0 0.0
    %574 = vmatpush.msra.mxu0 0.0
    %575 = vmatpush.msra.mxu0 0.0
    %576 = vmatpush.msra.mxu0 %v554
    %577 = vmatpush.msra.mxu0 %v553
    %578 = vmatpush.msra.mxu0 %v552
    %579 = vmatpush.msra.mxu0 %v551
    %580 = vmatmul.f32.gmra.mxu0 %v556
    %v581 = vpop.f32.mrf.mxu0
    %v582 = vadd.f32 0.0, %v581
    %583 = vmatmul.f32.gmra.mxu0 %v559
    %v584 = vpop.f32.mrf.mxu0
    %v585 = vadd.f32 0.0, %v584
    %586 = vmatmul.f32.gmra.mxu0 %v562
    %v587 = vpop.f32.mrf.mxu0
    %v588 = vadd.f32 0.0, %v587
    %589 = vdwg.mxu0
    %vm590 = vcmask 7168
    %591 = vst.msk [vmem:[%s13] sm:$0xff] %vm590, %v582
    %592 = vst.msk [vmem:[%s13 + $0x8] sm:$0xff] %vm590, %v585
    %593 = vst.msk [vmem:[%s13 + $0x10] sm:$0xff] %vm590, %v588
    // Predicated region
    $region62: #{tpu_custom_call.1} parent=1 // pred_check
      _
    $region63: #{tpu_custom_call.1} parent=1 // pred_check_branch
      %595 = sbr.rel (0) target = $region65
    $region64: #{tpu_custom_call.1} parent=1 // pred_region
      _
    $region65: #{tpu_custom_call.1} parent=1 // pred_fallthru
      _
    // Predicated region
    $region66: #{tpu_custom_call.1} parent=1 // pred_check
      _
    $region67: #{tpu_custom_call.1} parent=1 // pred_check_branch
      %597 = sbr.rel (0) target = $region69
    $region68: #{tpu_custom_call.1} parent=1 // pred_region
      _
    $region69: #{tpu_custom_call.1} parent=1 // pred_fallthru
      _
    %598 = vsyncpa [#allocation3], 1
    %599 = vsyncpa [#allocation5], 1

</llo_original>
